<compile_context>
chip_gen: v7x
topology: tpu7x:2x2x1
jax: 0.10.0
libtpu: 0.0.40
codegen_flags: <defaults>
</compile_context>

<pallas_src>
import functools

import jax
import jax.numpy as jnp
from jax import lax
from jax.experimental import pallas as pl
from jax.experimental.pallas import tpu as pltpu


def _round_up(x, m):
    return ((x + m - 1) // m) * m


def _weightnet_kernel(models_ref, w1_ref, fcw_ref, hidden_ref, logits_ref,
                      *, p, tp):
    """One param tile: hidden_tile = sum_s(Models*w1); logits += hidden_tile @ fc_w^T."""
    i = pl.program_id(0)

    @pl.when(i == 0)
    def _init():
        logits_ref[...] = jnp.zeros_like(logits_ref)

    # (S+1, TP) elementwise product on the VPU.
    prod = models_ref[...].astype(jnp.float32) * w1_ref[...].astype(jnp.float32)
    fcw = fcw_ref[...].astype(jnp.float32)                      # (A, TP) lane-dense

    if p % tp != 0:
        # Ragged last tile: OOB block contents are unspecified -> mask AFTER the
        # multiply so garbage/NaN never reaches the reductions.
        lane = lax.broadcasted_iota(jnp.int32, (1, tp), 1)
        valid = (i * tp + lane) < p                             # (1, TP)
        prod = jnp.where(valid, prod, 0.0)
        fcw = jnp.where(valid, fcw, 0.0)

    # Sublane reduce (XLU) -> (1, TP) hidden tile, stored lane-dense.
    hidden_tile = jnp.sum(prod, axis=0, keepdims=True)
    hidden_ref[...] = hidden_tile

    # Partial fc: contract over the lane dim of both operands:
    # (1, TP) x (A, TP) -> (1, A), accumulated in the resident f32 output.
    logits_ref[...] += lax.dot_general(
        hidden_tile, fcw,
        dimension_numbers=(((1,), (1,)), ((), ())),
        preferred_element_type=jnp.float32)


def weightnet_forward(models, w1, fc_w, fc_b, clients, *, tp=None,
                      vmem_budget_bytes=40 * 1024 * 1024):
    """hidden (1, P) and out (1, selected_client_num), matching WeightNet.forward."""
    s1, p = models.shape
    a, p2 = fc_w.shape
    assert p2 == p, "fc weight must be (all_client_num, param_shape)"
    assert w1.shape == (s1, p)

    lane = 128
    p128 = _round_up(p, lane)

    # Double-buffered f32 bytes streamed per param column:
    #   models + w1 (2*s1 rows) + fc_w (a rows) in, hidden (1 row) out.
    bytes_per_col = 2 * 4 * (2 * s1 + a + 1)
    tp_vmem = max(lane, (vmem_budget_bytes // bytes_per_col) // lane * lane)
    if tp is None:
        tp = 65536                       # sweet spot for the streaming regime
    tp = max(lane, min(_round_up(tp, lane), tp_vmem, p128))
    n_tiles = pl.cdiv(p, tp)

    kernel = functools.partial(_weightnet_kernel, p=p, tp=tp)

    hidden, logits = pl.pallas_call(
        kernel,
        out_shape=(jax.ShapeDtypeStruct((1, p), jnp.float32),   # hidden
                   jax.ShapeDtypeStruct((1, a), jnp.float32)),  # logits (pre-bias)
        grid_spec=pltpu.PrefetchScalarGridSpec(
            num_scalar_prefetch=0,
            grid=(n_tiles,),
            in_specs=[
                pl.BlockSpec((s1, tp), lambda i: (0, i)),       # Models tile
                pl.BlockSpec((s1, tp), lambda i: (0, i)),       # w1 tile
                pl.BlockSpec((a, tp), lambda i: (0, i)),        # fc.weight, native (A, P)
            ],
            out_specs=(
                pl.BlockSpec((1, tp), lambda i: (0, i)),        # hidden tile
                pl.BlockSpec((1, a), lambda i: (0, 0)),         # logits accumulator
            ),
        ),
        compiler_params=pltpu.CompilerParams(
            dimension_semantics=("arbitrary",),                 # reduction axis
            vmem_limit_bytes=48 * 1024 * 1024,                  # safe on v7x (64 MiB)
        ),
    )(models, w1, fc_w)

    # Tiny epilogue in plain JAX (A*M FLOPs): bias add + logits @ Clients^T.
    logits = logits + fc_b.reshape(1, a).astype(jnp.float32)
    out = logits @ clients.astype(jnp.float32).T
    return hidden, out


if __name__ == "__main__":
    key = jax.random.PRNGKey(0)
    k_w1, k_fcw, k_models, k_clients = jax.random.split(key, 4)

    def make_case(all_client_num, param_shape, selected_client_num):
        w1 = jax.random.normal(k_w1, (selected_client_num + 1, param_shape),
                               dtype=jnp.float32)
        fc_w = jax.random.uniform(k_fcw, (all_client_num, param_shape),
                                  minval=-0.1, maxval=0.1, dtype=jnp.float32)
        fc_b = jnp.full((all_client_num,), 0.01, dtype=jnp.float32)
        models = jax.random.normal(k_models,
                                   (selected_client_num + 1, param_shape),
                                   dtype=jnp.float32)
        clients = jax.random.bernoulli(
            k_clients, 0.5,
            (selected_client_num, all_client_num)).astype(jnp.int32)
        return models, w1, fc_w, fc_b, clients

    def reference(models, w1, fc_w, fc_b, clients):
        hidden = jnp.sum(models * w1, axis=0, keepdims=True)
        logits = hidden @ fc_w.T + fc_b
        return hidden, logits @ clients.astype(jnp.float32).T

    # Case 1: P=200 (not a lane multiple), tp=128 -> grid of 2, exercises the
    # multi-tile accumulation path AND the ragged-last-tile in-kernel masking.
    models, w1, fc_w, fc_b, clients = make_case(8, 200, 4)
    hidden, out = weightnet_forward(models, w1, fc_w, fc_b, clients, tp=128)
    jax.block_until_ready((hidden, out))
    h_ref, o_ref = reference(models, w1, fc_w, fc_b, clients)
    assert hidden.shape == (1, 200) and out.shape == (1, 4)
    assert jnp.allclose(hidden, h_ref, atol=1e-5, rtol=1e-5)
    assert jnp.allclose(out, o_ref, atol=1e-4, rtol=1e-4)

    # Case 2: P=256, auto tile -> single tile, no masking path.
    models, w1, fc_w, fc_b, clients = make_case(8, 256, 4)
    hidden, out = weightnet_forward(models, w1, fc_w, fc_b, clients)
    jax.block_until_ready((hidden, out))
    h_ref, o_ref = reference(models, w1, fc_w, fc_b, clients)
    assert hidden.shape == (1, 256) and out.shape == (1, 4)
    assert jnp.allclose(hidden, h_ref, atol=1e-5, rtol=1e-5)
    assert jnp.allclose(out, o_ref, atol=1e-4, rtol=1e-4)

    print("KERNEL_OK")
</pallas_src>

<mosaic_0001>
module attributes {stable_mosaic.version = 11 : i64} {
  func.func @_weightnet_kernel(%arg0: i32, %arg1: memref<5x128xf32, #tpu.memory_space<vmem>>, %arg2: memref<5x128xf32, #tpu.memory_space<vmem>>, %arg3: memref<8x128xf32, #tpu.memory_space<vmem>>, %arg4: memref<1x128xf32, #tpu.memory_space<vmem>>, %arg5: memref<1x8xf32, #tpu.memory_space<vmem>>) attributes {dimension_semantics = [#tpu.dimension_semantics<arbitrary>], iteration_bounds = array<i64: 2>, scalar_prefetch = 0 : i64, scratch_operands = 0 : i64, tpu.core_type = #tpu.core_type<tc>, window_params = [{transform_indices = @transform_0, window_bounds = array<i64: 5, 128>}, {transform_indices = @transform_1, window_bounds = array<i64: 5, 128>}, {transform_indices = @transform_2, window_bounds = array<i64: 8, 128>}, {transform_indices = @transform_3, window_bounds = array<i64: 1, 128>}, {pipeline_mode = #tpu.pipeline_mode<synchronous>, transform_indices = @transform_4, window_bounds = array<i64: 1, 8>}]} {
    %c0_i32 = arith.constant 0 : i32
    %0 = arith.cmpi eq, %arg0, %c0_i32 : i32
    %1 = arith.extui %0 : i1 to i32
    %c0_i32_0 = arith.constant 0 : i32
    %2 = arith.cmpi ne, %1, %c0_i32_0 : i32
    scf.if %2 {
      %cst_15 = arith.constant 0.000000e+00 : f32
      %28 = vector.broadcast %cst_15 : f32 to vector<1x8xf32>
      %c0_16 = arith.constant 0 : index
      %c0_17 = arith.constant 0 : index
      %29 = vector.load %arg5[%c0_16, %c0_17] : memref<1x8xf32, #tpu.memory_space<vmem>>, vector<1x8xf32>
      tpu.vector_store %arg5[%c0_16, %c0_17], %28 {strides = array<i32>} : memref<1x8xf32, #tpu.memory_space<vmem>>, vector<1x8xf32>,
    } else {
    }
    %c0 = arith.constant 0 : index
    %c0_1 = arith.constant 0 : index
    %3 = vector.load %arg1[%c0, %c0_1] : memref<5x128xf32, #tpu.memory_space<vmem>>, vector<5x128xf32>
    %c0_2 = arith.constant 0 : index
    %c0_3 = arith.constant 0 : index
    %4 = vector.load %arg2[%c0_2, %c0_3] : memref<5x128xf32, #tpu.memory_space<vmem>>, vector<5x128xf32>
    %5 = arith.mulf %3, %4 : vector<5x128xf32>
    %c0_4 = arith.constant 0 : index
    %c0_5 = arith.constant 0 : index
    %6 = vector.load %arg3[%c0_4, %c0_5] : memref<8x128xf32, #tpu.memory_space<vmem>>, vector<8x128xf32>
    %7 = tpu.iota {dimensions = array<i32: 1>} : vector<1x128xi32>
    %c128_i32 = arith.constant 128 : i32
    %8 = arith.muli %arg0, %c128_i32 : i32
    %9 = vector.broadcast %8 : i32 to vector<1x128xi32>
    %10 = arith.addi %9, %7 : vector<1x128xi32>
    %c200_i32 = arith.constant 200 : i32
    %11 = vector.broadcast %c200_i32 : i32 to vector<1x128xi32>
    %12 = arith.cmpi slt, %10, %11 : vector<1x128xi32>
    %cst = arith.constant 0.000000e+00 : f32
    %13 = vector.shape_cast %12 : vector<1x128xi1> to vector<1x128xi1>
    %14 = vector.broadcast %13 : vector<1x128xi1> to vector<5x128xi1>
    %15 = vector.broadcast %cst : f32 to vector<5x128xf32>
    %16 = arith.select %14, %5, %15 : vector<5x128xi1>, vector<5x128xf32>
    %cst_6 = arith.constant 0.000000e+00 : f32
    %17 = vector.shape_cast %12 : vector<1x128xi1> to vector<1x128xi1>
    %18 = vector.broadcast %17 : vector<1x128xi1> to vector<8x128xi1>
    %19 = vector.broadcast %cst_6 : f32 to vector<8x128xf32>
    %20 = arith.select %18, %6, %19 : vector<8x128xi1>, vector<8x128xf32>
    %cst_7 = arith.constant dense<0.000000e+00> : vector<128xf32>
    %21 = vector.multi_reduction <add>, %16, %cst_7 [0] : vector<5x128xf32> to vector<128xf32>
    %22 = vector.shape_cast %21 : vector<128xf32> to vector<1x128xf32>
    %c0_8 = arith.constant 0 : index
    %c0_9 = arith.constant 0 : index
    %23 = vector.load %arg4[%c0_8, %c0_9] : memref<1x128xf32, #tpu.memory_space<vmem>>, vector<1x128xf32>
    tpu.vector_store %arg4[%c0_8, %c0_9], %22 {strides = array<i32>} : memref<1x128xf32, #tpu.memory_space<vmem>>, vector<1x128xf32>,
    %c0_10 = arith.constant 0 : index
    %c0_11 = arith.constant 0 : index
    %24 = vector.load %arg5[%c0_10, %c0_11] : memref<1x8xf32, #tpu.memory_space<vmem>>, vector<1x8xf32>
    %cst_12 = arith.constant dense<0.000000e+00> : vector<1x8xf32>
    %25 = tpu.matmul %22, %20, %cst_12 {dimension_numbers = #tpu.dot_dimension_numbers<[1], [1], [0], [0], [0, 0, 1, 0], [], []>} : vector<1x128xf32>, vector<8x128xf32>, vector<1x8xf32> -> vector<1x8xf32>
    %26 = arith.addf %24, %25 : vector<1x8xf32>
    %c0_13 = arith.constant 0 : index
    %c0_14 = arith.constant 0 : index
    %27 = vector.load %arg5[%c0_13, %c0_14] : memref<1x8xf32, #tpu.memory_space<vmem>>, vector<1x8xf32>
    tpu.vector_store %arg5[%c0_13, %c0_14], %26 {strides = array<i32>} : memref<1x8xf32, #tpu.memory_space<vmem>>, vector<1x8xf32>,
    return
  }
  func.func @transform_0(%arg0: i32) -> (i32, i32) {
    %c0_i32 = arith.constant 0 : i32
    %c0_i32_0 = arith.constant 0 : i32
    return %c0_i32, %arg0 : i32, i32
  }
  func.func @transform_1(%arg0: i32) -> (i32, i32) {
    %c0_i32 = arith.constant 0 : i32
    %c0_i32_0 = arith.constant 0 : i32
    return %c0_i32, %arg0 : i32, i32
  }
  func.func @transform_2(%arg0: i32) -> (i32, i32) {
    %c0_i32 = arith.constant 0 : i32
    %c0_i32_0 = arith.constant 0 : i32
    return %c0_i32, %arg0 : i32, i32
  }
  func.func @transform_3(%arg0: i32) -> (i32, i32) {
    %c0_i32 = arith.constant 0 : i32
    %c0_i32_0 = arith.constant 0 : i32
    return %c0_i32, %arg0 : i32, i32
  }
  func.func @transform_4(%arg0: i32) -> (i32, i32) {
    %c0_i32 = arith.constant 0 : i32
    %c0_i32_0 = arith.constant 0 : i32
    %c0_i32_1 = arith.constant 0 : i32
    return %c0_i32, %c0_i32_0 : i32, i32
  }
}

</mosaic_0001>

<llo_original>
// kernel: tpu_custom_call.1
$region0: #{tpu_custom_call.1}
  #allocation0 [shape = 'u32[]', space=smem, size = 0x4, offset = 0x4, fixed_abs, tag = 'smem constant byte address 0x4 - core index']
  #allocation1 [shape = 'u32[144,128]{1,0:T(1,128)}', space=vmem, size = 0x12000, scoped, tag = 'internal scratch']
  %s0 = inlined_call_operand.hbm [shape: f32[5,200], index: 0, kind: input, shape index: {}]
  %s1 = inlined_call_operand.hbm [shape: f32[5,200], index: 1, kind: input, shape index: {}]
  %s2 = inlined_call_operand.hbm [shape: f32[8,200], index: 2, kind: input, shape index: {}]
  %s3 = inlined_call_operand.hbm [shape: f32[1,200], index: 3, kind: output, shape index: {0}]
  %s4 = inlined_call_operand.hbm [shape: f32[1,8], index: 4, kind: output, shape index: {1}]
  %5 = xla_tuple %s3, %s4
  %s6 = sld [smem:[#allocation0]]
  $region69: #{tpu_custom_call.1} parent=0
    _
  %s8 = ssub.s32 1, %s6
  %s9 = scalar_select 0, %s8, %s6
  $region1: #{tpu_custom_call.1} parent=0
    #allocation2 [shape = 'u8[8192]{0}', space=vmem, size = 0x2000, scoped, tag = 'input window, operand 0']
    #allocation3 [shape = 's32[2]{0}', space=sflag, size = 0x8, scoped, tag = 'scoped memory for tpu_custom_call.1']
    #allocation4 [shape = 's32[2]{0}', space=sflag, size = 0x8, scoped, tag = 'scoped memory for tpu_custom_call.1']
    #allocation5 [shape = 'u8[8192]{0}', space=vmem, size = 0x2000, scoped, tag = 'input window, operand 1']
    #allocation6 [shape = 's32[2]{0}', space=sflag, size = 0x8, scoped, tag = 'scoped memory for tpu_custom_call.1']
    #allocation7 [shape = 'u8[8192]{0}', space=vmem, size = 0x2000, scoped, tag = 'input window, operand 2']
    #allocation8 [shape = 'u8[1024]{0}', space=vmem, size = 0x400, scoped, tag = 'output window, operand 0']
    #allocation9 [shape = 'u8[512]{0}', space=vmem, size = 0x400, scoped, tag = 'output window, operand 1, single buffered']
    #allocation10 [shape = 's32[1]{0}', space=sflag, size = 0x4, scoped, tag = 'scoped memory for tpu_custom_call.1']
    %10 = vsyncpa [#allocation3], 0
    %s11 = scalar_lea.sflag [#allocation3], 1
    %12 = vsyncpa %s11, 0
    %13 = vsyncpa [#allocation6], 0
    %s14 = scalar_lea.sflag [#allocation6], 1
    %15 = vsyncpa %s14, 0
    %16 = vsyncpa [#allocation4], 0
    %s17 = scalar_lea.sflag [#allocation4], 1
    %18 = vsyncpa %s17, 0
    %19 = vsyncpa [#allocation10], 0
    loop: start=0, step=1, limit=4
    $region2: #{tpu_custom_call.1} parent=1 // loop_pre_header
      _
    $region3: #{tpu_custom_call.1} parent=1 // loop_header
      %s21 = sphi 0, %s25
      %p22 = scmp.ge.s32.totalorder %s21, 4
      %s31 = sphi 0, %s33
      %s34 = sphi 0, %s31
      %s35 = sphi 0, %s34
      %s51 = sphi 0, %s35
      %s57 = sphi 0, %s59
      %s60 = sphi 0, %s57
      %s61 = sphi 0, %s60
      %s77 = sphi 0, %s61
      %s83 = sphi 0, %s85
      %s86 = sphi 0, %s83
      %s87 = sphi 0, %s86
      %s103 = sphi 0, %s87
      %s109 = sphi 0, %s111
      %s112 = sphi 0, %s109
      %s113 = sphi 0, %s112
      %s129 = sphi 0, %s113
      %s133 = sphi 0, %s133
      %s135 = sphi 0, %s133
      %s136 = sphi 0, %s135
      %s150 = sphi 0, %s136
    $region4: #{tpu_custom_call.1} parent=1 // loop_header_branch
      %24 = sbr.rel (%p22) target = $region8
    $region5: #{tpu_custom_call.1} parent=1 // loop_body
      %s26 = ssub.s32 %s21, 1
      %s27 = ssub.s32 %s21, 2
      %s28 = sadd.s32 %s21, 1
      %s29 = ssub.s32 %s21, %s28
      %p30 = scmp.eq.s32.totalorder %s29, 0
      %s32 = sadd.s32 %s31, 1
      %s33 = scalar_select %p30, %s31, %s32
      %p36 = pneg %p30
      %p37 = scmp.eq.s32.totalorder %s21, 1
      %p38 = por %p36, %p37
      %p39 = scmp.ne.s32.totalorder %s31, %s34
      %p40 = scmp.eq.s32.totalorder %s21, 0
      %p41 = por %p39, %p40
      %p42 = scmp.ne.s32.totalorder %s31, %s34
      %p43 = scmp.eq.s32.totalorder %s26, 1
      %p44 = por %p42, %p43
      %p45 = scmp.ne.s32.totalorder %s34, %s35
      %p46 = scmp.eq.s32.totalorder %s26, 0
      %p47 = por %p45, %p46
      %p48 = scmp.ne.s32.totalorder %s34, %s35
      %p49 = scmp.eq.s32.totalorder %s27, 1
      %p50 = por %p48, %p49
      %p52 = scmp.ne.s32.totalorder %s35, %s51
      %p53 = scmp.eq.s32.totalorder %s27, 0
      %p54 = por %p52, %p53
      %s55 = ssub.s32 %s21, %s28
      %p56 = scmp.eq.s32.totalorder %s55, 0
      %s58 = sadd.s32 %s57, 1
      %s59 = scalar_select %p56, %s57, %s58
      %p62 = pneg %p56
      %p63 = scmp.eq.s32.totalorder %s21, 1
      %p64 = por %p62, %p63
      %p65 = scmp.ne.s32.totalorder %s57, %s60
      %p66 = scmp.eq.s32.totalorder %s21, 0
      %p67 = por %p65, %p66
      %p68 = scmp.ne.s32.totalorder %s57, %s60
      %p69 = scmp.eq.s32.totalorder %s26, 1
      %p70 = por %p68, %p69
      %p71 = scmp.ne.s32.totalorder %s60, %s61
      %p72 = scmp.eq.s32.totalorder %s26, 0
      %p73 = por %p71, %p72
      %p74 = scmp.ne.s32.totalorder %s60, %s61
      %p75 = scmp.eq.s32.totalorder %s27, 1
      %p76 = por %p74, %p75
      %p78 = scmp.ne.s32.totalorder %s61, %s77
      %p79 = scmp.eq.s32.totalorder %s27, 0
      %p80 = por %p78, %p79
      %s81 = ssub.s32 %s21, %s28
      %p82 = scmp.eq.s32.totalorder %s81, 0
      %s84 = sadd.s32 %s83, 1
      %s85 = scalar_select %p82, %s83, %s84
      %p88 = pneg %p82
      %p89 = scmp.eq.s32.totalorder %s21, 1
      %p90 = por %p88, %p89
      %p91 = scmp.ne.s32.totalorder %s83, %s86
      %p92 = scmp.eq.s32.totalorder %s21, 0
      %p93 = por %p91, %p92
      %p94 = scmp.ne.s32.totalorder %s83, %s86
      %p95 = scmp.eq.s32.totalorder %s26, 1
      %p96 = por %p94, %p95
      %p97 = scmp.ne.s32.totalorder %s86, %s87
      %p98 = scmp.eq.s32.totalorder %s26, 0
      %p99 = por %p97, %p98
      %p100 = scmp.ne.s32.totalorder %s86, %s87
      %p101 = scmp.eq.s32.totalorder %s27, 1
      %p102 = por %p100, %p101
      %p104 = scmp.ne.s32.totalorder %s87, %s103
      %p105 = scmp.eq.s32.totalorder %s27, 0
      %p106 = por %p104, %p105
      %s107 = ssub.s32 %s21, %s28
      %p108 = scmp.eq.s32.totalorder %s107, 0
      %s110 = sadd.s32 %s109, 1
      %s111 = scalar_select %p108, %s109, %s110
      %p114 = pneg %p108
      %p115 = scmp.eq.s32.totalorder %s21, 1
      %p116 = por %p114, %p115
      %p117 = scmp.ne.s32.totalorder %s109, %s112
      %p118 = scmp.eq.s32.totalorder %s21, 0
      %p119 = por %p117, %p118
      %p120 = scmp.ne.s32.totalorder %s109, %s112
      %p121 = scmp.eq.s32.totalorder %s26, 1
      %p122 = por %p120, %p121
      %p123 = scmp.ne.s32.totalorder %s112, %s113
      %p124 = scmp.eq.s32.totalorder %s26, 0
      %p125 = por %p123, %p124
      %p126 = scmp.ne.s32.totalorder %s112, %s113
      %p127 = scmp.eq.s32.totalorder %s27, 1
      %p128 = por %p126, %p127
      %p130 = scmp.ne.s32.totalorder %s113, %s129
      %p131 = scmp.eq.s32.totalorder %s27, 0
      %p132 = por %p130, %p131
      %s134 = sadd.s32 %s133, 1
      %p137 = scmp.eq.s32.totalorder %s21, 1
      %p138 = scmp.ne.s32.totalorder %s133, %s135
      %p139 = scmp.eq.s32.totalorder %s21, 0
      %p140 = por %p138, %p139
      %p141 = scmp.ne.s32.totalorder %s133, %s135
      %p142 = scmp.eq.s32.totalorder %s26, 1
      %p143 = por %p141, %p142
      %p144 = scmp.ne.s32.totalorder %s135, %s136
      %p145 = scmp.eq.s32.totalorder %s26, 0
      %p146 = por %p144, %p145
      %p147 = scmp.ne.s32.totalorder %s135, %s136
      %p148 = scmp.eq.s32.totalorder %s27, 1
      %p149 = por %p147, %p148
      %p151 = scmp.ne.s32.totalorder %s136, %s150
      %p152 = scmp.eq.s32.totalorder %s27, 0
      %p153 = por %p151, %p152
      %p154 = scmp.le.s32.totalorder 1, %s21
      %p155 = scmp.lt.s32.totalorder %s21, 3
      %p156 = pnand %p154, %p155
      %p157 = pneg %p156
      // Predicated region
      $region9: #{tpu_custom_call.1} parent=5 // pred_check
        _
      $region10: #{tpu_custom_call.1} parent=5 // pred_check_branch
        %159 = sbr.rel (%p156) target = $region12
      $region11: #{tpu_custom_call.1} parent=5 // pred_region
        %s160 = ssub.s32 %s21, 1
      $region12: #{tpu_custom_call.1} parent=5 // pred_fallthru
        _
      %p161 = scmp.lt.s32.totalorder %s21, 2
      // Predicated region
      $region13: #{tpu_custom_call.1} parent=5 // pred_check
        %p162 = pneg %p161
      $region14: #{tpu_custom_call.1} parent=5 // pred_check_branch
        %164 = sbr.rel (%p162) target = $region16
      $region15: #{tpu_custom_call.1} parent=5 // pred_region
        // Predicated region
        $region17: #{tpu_custom_call.1} parent=15 // pred_check
          %p165 = pneg %p41
        $region18: #{tpu_custom_call.1} parent=15 // pred_check_branch
          %167 = sbr.rel (%p165) target = $region20
        $region19: #{tpu_custom_call.1} parent=15 // pred_region
          %s168 = sand.u32 %s31, 1
          %s169 = scalar_lea.sflag [#allocation3], %s168
          %s170 = sand.u32 %s31, 1
          %s171 = smul.addr %s170, 8
          %s172 = scalar_lea.vmem [#allocation2], %s171
          %s174 = ssub.s32 128, 128
          %175 = vsyncadd %s169, %s174
          %s176 = smul.addr %s21, 128
          %s177 = scalar_lea.hbm %s0, %s176
          %s179 = sshll.u32 %s172, 4
          %s180 = int_to_ptr.vmem [resolvable:$true] %s179
          %182 = dma.hbm_to_vmem [thread:$0]  %s177, 128, %s180, %s169
        $region20: #{tpu_custom_call.1} parent=15 // pred_fallthru
          _
        // Predicated region
        $region21: #{tpu_custom_call.1} parent=15 // pred_check
          %p183 = pneg %p67
        $region22: #{tpu_custom_call.1} parent=15 // pred_check_branch
          %185 = sbr.rel (%p183) target = $region24
        $region23: #{tpu_custom_call.1} parent=15 // pred_region
          %s186 = sand.u32 %s21, 1
          %s187 = scalar_lea.sflag [#allocation6], %s186
          %s188 = sand.u32 %s57, 1
          %s189 = smul.addr %s188, 8
          %s190 = scalar_lea.vmem [#allocation5], %s189
          %s192 = ssub.s32 128, 128
          %193 = vsyncadd %s187, %s192
          %s194 = smul.addr %s21, 128
          %s195 = scalar_lea.hbm %s1, %s194
          %s197 = sshll.u32 %s190, 4
          %s198 = int_to_ptr.vmem [resolvable:$true] %s197
          %200 = dma.hbm_to_vmem [thread:$0]  %s195, 128, %s198, %s187
        $region24: #{tpu_custom_call.1} parent=15 // pred_fallthru
          _
        // Predicated region
        $region25: #{tpu_custom_call.1} parent=15 // pred_check
          %p201 = pneg %p93
        $region26: #{tpu_custom_call.1} parent=15 // pred_check_branch
          %203 = sbr.rel (%p201) target = $region28
        $region27: #{tpu_custom_call.1} parent=15 // pred_region
          %s204 = sand.u32 %s21, 1
          %s205 = scalar_lea.sflag [#allocation6], %s204
          %s206 = sand.u32 %s83, 1
          %s207 = smul.addr %s206, 8
          %s208 = scalar_lea.vmem [#allocation7], %s207
          %s210 = ssub.s32 128, 128
          %211 = vsyncadd %s205, %s210
          %s212 = smul.addr %s21, 128
          %s213 = scalar_lea.hbm %s2, %s212
          %s215 = sshll.u32 %s208, 4
          %s216 = int_to_ptr.vmem [resolvable:$true] %s215
          %218 = dma.hbm_to_vmem [thread:$0]  %s213, 128, %s216, %s205
        $region28: #{tpu_custom_call.1} parent=15 // pred_fallthru
          _
      $region16: #{tpu_custom_call.1} parent=5 // pred_fallthru
        _
      %p219 = scmp.le.s32.totalorder 1, %s21
      %p220 = scmp.lt.s32.totalorder %s21, 3
      %p221 = pnand %p219, %p220
      %p222 = pneg %p221
      // Predicated region
      $region29: #{tpu_custom_call.1} parent=5 // pred_check
        _
      $region30: #{tpu_custom_call.1} parent=5 // pred_check_branch
        %224 = sbr.rel (%p221) target = $region32
      $region31: #{tpu_custom_call.1} parent=5 // pred_region
        %s225 = ssub.s32 %s21, 1
        %s226 = sand.u32 %s34, 1
        %s227 = scalar_lea.sflag [#allocation3], %s226
        %s228 = sand.u32 %s34, 1
        %s229 = smul.addr %s228, 8
        %s230 = scalar_lea.vmem [#allocation2], %s229
        // Predicated region
        $region33: #{tpu_custom_call.1} parent=31 // pred_check
          %p231 = pneg %p47
        $region34: #{tpu_custom_call.1} parent=31 // pred_check_branch
          %233 = sbr.rel (%p231) target = $region36
        $region35: #{tpu_custom_call.1} parent=31 // pred_region
          %234 = dma.done %s227, 128
        $region36: #{tpu_custom_call.1} parent=31 // pred_fallthru
          _
        %s235 = sand.u32 %s26, 1
        %s236 = scalar_lea.sflag [#allocation6], %s235
        %s237 = sand.u32 %s60, 1
        %s238 = smul.addr %s237, 8
        %s239 = scalar_lea.vmem [#allocation5], %s238
        // Predicated region
        $region37: #{tpu_custom_call.1} parent=31 // pred_check
          %p240 = pneg %p73
        $region38: #{tpu_custom_call.1} parent=31 // pred_check_branch
          %242 = sbr.rel (%p240) target = $region40
        $region39: #{tpu_custom_call.1} parent=31 // pred_region
          %243 = dma.done %s236, 128
        $region40: #{tpu_custom_call.1} parent=31 // pred_fallthru
          _
        %s244 = sand.u32 %s26, 1
        %s245 = scalar_lea.sflag [#allocation6], %s244
        %s246 = sand.u32 %s86, 1
        %s247 = smul.addr %s246, 8
        %s248 = scalar_lea.vmem [#allocation7], %s247
        // Predicated region
        $region41: #{tpu_custom_call.1} parent=31 // pred_check
          %p249 = pneg %p99
        $region42: #{tpu_custom_call.1} parent=31 // pred_check_branch
          %251 = sbr.rel (%p249) target = $region44
        $region43: #{tpu_custom_call.1} parent=31 // pred_region
          %252 = dma.done %s245, 128
        $region44: #{tpu_custom_call.1} parent=31 // pred_fallthru
          _
        %s253 = sand.u32 %s34, 1
        %s254 = scalar_lea.sflag [#allocation3], %s253
        %s255 = sand.u32 %s34, 1
        %s256 = smul.addr %s255, 8
        %s257 = scalar_lea.vmem [#allocation2], %s256
        %p258 = pneg %p47
        %p259 = pneg %p44
        %s260 = sand.u32 %s26, 1
        %s261 = scalar_lea.sflag [#allocation6], %s260
        %s262 = sand.u32 %s60, 1
        %s263 = smul.addr %s262, 8
        %s264 = scalar_lea.vmem [#allocation5], %s263
        %p265 = pneg %p73
        %p266 = pneg %p70
        %s267 = sand.u32 %s26, 1
        %s268 = scalar_lea.sflag [#allocation6], %s267
        %s269 = sand.u32 %s86, 1
        %s270 = smul.addr %s269, 8
        %s271 = scalar_lea.vmem [#allocation7], %s270
        %p272 = pneg %p99
        %p273 = pneg %p96
        %p274 = pneg %p125
        %p275 = pneg %p122
        %s276 = sand.u32 %s112, 1
        %s277 = scalar_lea.sflag [#allocation4], %s276
        %s278 = sand.u32 %s112, 1
        %s279 = scalar_lea.vmem [#allocation8], %s278
        %p280 = pneg %p146
        %p281 = pneg %p143
        %p282 = scmp.eq.s32.totalorder %s26, 0
        // Predicated region
        $region45: #{tpu_custom_call.1} parent=31 // pred_check
          %p283 = pneg %p282
        $region46: #{tpu_custom_call.1} parent=31 // pred_check_branch
          %285 = sbr.rel (%p283) target = $region48
        $region47: #{tpu_custom_call.1} parent=31 // pred_region
          %vm286 = vcmask 57344
          %287 = vst.msk [vmem:[#allocation9] sm:$0x1] %vm286, 0.0
        $region48: #{tpu_custom_call.1} parent=31 // pred_fallthru
          _
        %v288 = vld [vmem:[%s230] sm:$0x1f]
        %v289 = vld [vmem:[%s239] sm:$0x1f]
        %v290 = vmul.f32 %v288, %v289
        %v291 = vld [vmem:[%s248] sm:$0xff]
        %v292 = vlaneseq
        %v293 = vand.u32 %v292, 127
        %s294 = smul.u32 %s26, 128
        %v295 = vstv %s294
        %v296 = vadd.s32 %v295, %v293
        %vm297 = vcmp.lt.s32.totalorder %v296, 200
        %v298 = vsel %vm297, 1, 0
        %vm299 = vcmp.eq.s32.totalorder %v298, 1
        %v300 = vsel %vm299, %v290, 0.0
        %v301 = vsel %vm299, %v291, 0.0
        %vm302 = vcmask 1044480
        %v303 = vsel %vm302, %v300, 0.0
        %v304 = vrot.slane %v303, 4
        %v305 = vadd.f32 %v303, %v304
        %v306 = vrot.slane %v305, 2
        %v307 = vadd.f32 %v305, %v306
        %v308 = vrot.slane %v307, 1
        %v309 = vadd.f32 %v307, %v308
        %310 = vst [vmem:[%s279] sm:$0x1] %v309
        %v311 = vld [vmem:[#allocation9] sm:$0x1]
        %312 = vmatprep.subr.mxu0 0.0
        %313 = vmatpush1.xpose.msra.mxu0 %v301
        %314 = vmatprep.subr.mxu0 0.0
        %315 = vmatpush1.xpose.msra.mxu0 0.0
        %316 = vmatprep.subr.mxu0 0.0
        %317 = vmatpush1.xpose.msra.mxu0 0.0
        %318 = vmatprep.subr.mxu0 0.0
        %319 = vmatpush1.xpose.msra.mxu0 0.0
        %320 = vmatprep.subr.mxu0 0.0
        %321 = vmatpush1.xpose.msra.mxu0 0.0
        %322 = vmatprep.subr.mxu0 0.0
        %323 = vmatpush1.xpose.msra.mxu0 0.0
        %324 = vmatprep.subr.mxu0 0.0
        %325 = vmatpush1.xpose.msra.mxu0 0.0
        %326 = vmatprep.subr.mxu0 0.0
        %327 = vmatpush1.xpose.msra.mxu0 0.0
        %328 = vmatprep.subr.mxu0 0.0
        %329 = vmatpush1.xpose.msra.mxu0 0.0
        %330 = vmatprep.subr.mxu0 0.0
        %331 = vmatpush1.xpose.msra.mxu0 0.0
        %332 = vmatprep.subr.mxu0 0.0
        %333 = vmatpush1.xpose.msra.mxu0 0.0
        %334 = vmatprep.subr.mxu0 0.0
        %335 = vmatpush1.xpose.msra.mxu0 0.0
        %336 = vmatprep.subr.mxu0 0.0
        %337 = vmatpush1.xpose.msra.mxu0 0.0
        %338 = vmatprep.subr.mxu0 0.0
        %339 = vmatpush1.xpose.msra.mxu0 0.0
        %340 = vmatprep.subr.mxu0 0.0
        %341 = vmatpush1.xpose.msra.mxu0 0.0
        %342 = vmatprep.subr.mxu0 0.0
        %343 = vmatpush1.xpose.msra.mxu0 0.0
        %344 = vmatprep.subr.mxu0 0.0
        %345 = vmatpush1.xpose.msra.mxu0 0.0
        %346 = vmatprep.subr.mxu0 0.0
        %347 = vmatpush1.xpose.msra.mxu0 0.0
        %348 = vmatprep.subr.mxu0 0.0
        %349 = vmatpush1.xpose.msra.mxu0 0.0
        %350 = vmatprep.subr.mxu0 0.0
        %351 = vmatpush1.xpose.msra.mxu0 0.0
        %352 = vmatprep.subr.mxu0 0.0
        %353 = vmatpush1.xpose.msra.mxu0 0.0
        %354 = vmatprep.subr.mxu0 0.0
        %355 = vmatpush1.xpose.msra.mxu0 0.0
        %356 = vmatprep.subr.mxu0 0.0
        %357 = vmatpush1.xpose.msra.mxu0 0.0
        %358 = vmatprep.subr.mxu0 0.0
        %359 = vmatpush1.xpose.msra.mxu0 0.0
        %360 = vmatprep.subr.mxu0 0.0
        %361 = vmatpush1.xpose.msra.mxu0 0.0
        %362 = vmatprep.subr.mxu0 0.0
        %363 = vmatpush1.xpose.msra.mxu0 0.0
        %364 = vmatprep.subr.mxu0 0.0
        %365 = vmatpush1.xpose.msra.mxu0 0.0
        %366 = vmatprep.subr.mxu0 0.0
        %367 = vmatpush1.xpose.msra.mxu0 0.0
        %368 = vmatprep.subr.mxu0 0.0
        %369 = vmatpush1.xpose.msra.mxu0 0.0
        %370 = vmatprep.subr.mxu0 0.0
        %371 = vmatpush1.xpose.msra.mxu0 0.0
        %372 = vmatprep.subr.mxu0 0.0
        %373 = vmatpush1.xpose.msra.mxu0 0.0
        %374 = vmatprep.subr.mxu0 0.0
        %375 = vmatpush1.xpose.msra.mxu0 0.0
        %376 = vmatprep.mubr.f32.mxu0 0.0
        %377 = vmatmul.mubr.f32.gmra.mrb[0].mxu0 %v309
        %v378 = vpop.f32.mrb[0].mxu0
        %v379 = vadd.f32 0.0, %v378
        %v380 = vpop.f32.mrb[0].mxu0
        %381 = vdwg.mxu0
        %v382 = vadd.f32 %v311, %v379
        %vm383 = vcmask 57344
        %384 = vst.msk [vmem:[#allocation9] sm:$0x1] %vm383, %v382
        %s385 = sand.u32 %s112, 1
        %s386 = scalar_lea.sflag [#allocation4], %s385
        %s387 = sand.u32 %s112, 1
        %s388 = scalar_lea.vmem [#allocation8], %s387
        // Predicated region
        $region49: #{tpu_custom_call.1} parent=31 // pred_check
          %p389 = pneg %p122
        $region50: #{tpu_custom_call.1} parent=31 // pred_check_branch
          %391 = sbr.rel (%p389) target = $region52
        $region51: #{tpu_custom_call.1} parent=31 // pred_region
          %s393 = ssub.s32 16, 16
          %394 = vsyncadd %s386, %s393
          %s395 = smul.addr %s26, 16
          %s396 = scalar_lea.hbm %s3, %s395
          %s398 = sshll.u32 %s388, 4
          %s399 = int_to_ptr.vmem [resolvable:$true] %s398
          %401 = dma.vmem_to_hbm [thread:$0]  %s399, 16, %s396, %s386
        $region52: #{tpu_custom_call.1} parent=31 // pred_fallthru
          _
        // Predicated region
        $region53: #{tpu_custom_call.1} parent=31 // pred_check
          %p402 = pneg %p143
        $region54: #{tpu_custom_call.1} parent=31 // pred_check_branch
          %404 = sbr.rel (%p402) target = $region56
        $region55: #{tpu_custom_call.1} parent=31 // pred_region
          %s406 = ssub.s32 16, 16
          %407 = vsyncadd [#allocation10], %s406
          %s409 = sshll.u32 [#allocation9], 4
          %s410 = int_to_ptr.vmem [resolvable:$true] %s409
          %412 = dma.vmem_to_hbm [thread:$0]  %s410, 16, %s4, [#allocation10]
        $region56: #{tpu_custom_call.1} parent=31 // pred_fallthru
          _
        // Predicated region
        $region57: #{tpu_custom_call.1} parent=31 // pred_check
          %p413 = pneg %p143
        $region58: #{tpu_custom_call.1} parent=31 // pred_check_branch
          %415 = sbr.rel (%p413) target = $region60
        $region59: #{tpu_custom_call.1} parent=31 // pred_region
          %416 = dma.done [#allocation10], 16
        $region60: #{tpu_custom_call.1} parent=31 // pred_fallthru
          _
      $region32: #{tpu_custom_call.1} parent=5 // pred_fallthru
        _
      %p417 = scmp.le.s32.totalorder 2, %s21
      // Predicated region
      $region61: #{tpu_custom_call.1} parent=5 // pred_check
        %p418 = pneg %p417
      $region62: #{tpu_custom_call.1} parent=5 // pred_check_branch
        %420 = sbr.rel (%p418) target = $region64
      $region63: #{tpu_custom_call.1} parent=5 // pred_region
        %s421 = ssub.s32 %s21, 2
        // Predicated region
        $region65: #{tpu_custom_call.1} parent=63 // pred_check
          %p422 = pneg %p128
        $region66: #{tpu_custom_call.1} parent=63 // pred_check_branch
          %424 = sbr.rel (%p422) target = $region68
        $region67: #{tpu_custom_call.1} parent=63 // pred_region
          %s425 = sand.u32 %s113, 1
          %s426 = scalar_lea.sflag [#allocation4], %s425
          %s427 = sand.u32 %s113, 1
          %s428 = scalar_lea.vmem [#allocation8], %s427
          %429 = dma.done %s426, 16
        $region68: #{tpu_custom_call.1} parent=63 // pred_fallthru
          _
      $region64: #{tpu_custom_call.1} parent=5 // pred_fallthru
        _
    $region6: #{tpu_custom_call.1} parent=1 // loop_footer
      %s25 = sadd.s32 1, %s21
    $region7: #{tpu_custom_call.1} parent=1 // loop_footer_branch
      %20 = sbr.rel target = $region3
    $region8: #{tpu_custom_call.1} parent=1 // loop_exit
      _
    %430 = vsyncpa [#allocation3], 1
    %s431 = scalar_lea.sflag [#allocation3], 1
    %432 = vsyncpa %s431, 1
    %433 = vsyncpa [#allocation6], 1
    %s434 = scalar_lea.sflag [#allocation6], 1
    %435 = vsyncpa %s434, 1
    %436 = vsyncpa [#allocation4], 1
    %s437 = scalar_lea.sflag [#allocation4], 1
    %438 = vsyncpa %s437, 1
    %439 = vsyncpa [#allocation10], 1

</llo_original>
